<compile_context>
chip_gen: v7x
topology: tpu7x:2x2x1
jax: 0.10.0
libtpu: 0.0.40
codegen_flags: <defaults>
</compile_context>

<pallas_src>
import jax
import jax.numpy as jnp
import numpy as np
from jax.experimental import pallas as pl
from jax.experimental.pallas import tpu as pltpu


def _round_up(x: int, m: int) -> int:
    return ((x + m - 1) // m) * m


def _pad_to(a, shape):
    """Zero-pad `a` up to `shape` (trailing pad on every axis)."""
    pads = [(0, s - d) for d, s in zip(a.shape, shape)]
    if all(p == (0, 0) for p in pads):
        return a
    return jnp.pad(a, pads)


def _fc_resnet_kernel(x_ref, w1_ref, b1_ref, w2_ref, b2_ref,
                      wa_ref, ba_ref, wb_ref, bb_ref,
                      wo_ref, bo_ref, o_ref, h_ref):
    """grid = (batch_tiles, num_res_blocks).

    axis 0 ("parallel")  : batch tiles -- shardable across TensorCores.
    axis 1 ("arbitrary") : residual blocks -- per-block weights streamed via
                           BlockSpec; `h_ref` (VMEM scratch, f32) carries the
                           activation slab between block steps.
    """
    k = pl.program_id(1)
    cdt = w2_ref.dtype  # matmul-input dtype (bf16 on the MXU; f32 accumulate)

    # first_fc (Linear -> ReLU, Linear -> ReLU) only on the first block step.
    @pl.when(k == 0)
    def _first_fc():
        h0 = jnp.dot(x_ref[...], w1_ref[...],
                     preferred_element_type=jnp.float32) + b1_ref[...]
        h0 = jnp.maximum(h0, 0.0)
        h0 = jnp.dot(h0.astype(cdt), w2_ref[...],
                     preferred_element_type=jnp.float32) + b2_ref[...]
        h_ref[...] = jnp.maximum(h0, 0.0)

    # Residual block k (only this block's weights are resident in VMEM).
    h = h_ref[...]
    h_c = h.astype(cdt)
    y = jnp.dot(h_c, wa_ref[0],
                preferred_element_type=jnp.float32) + ba_ref[0]
    y = jnp.maximum(y, 0.0)
    y = jnp.dot(y.astype(cdt), wb_ref[0],
                preferred_element_type=jnp.float32) + bb_ref[0]
    h = jnp.maximum(h + y, 0.0)
    h_ref[...] = h

    # Output head on the last block step (lane-dense padded out_dim).
    @pl.when(k == pl.num_programs(1) - 1)
    def _head():
        o_ref[...] = jnp.dot(h.astype(cdt), wo_ref[...],
                             preferred_element_type=jnp.float32) + bo_ref[...]


def cube3_fc_resnet_forward(x, params, *, batch_tile=None,
                            compute_dtype=jnp.bfloat16):
    """Pallas forward for Cube3FCResnet. x: (B, input_dim) float.

    params = (w1, b1, w2, b2, wa, ba, wb, bb, wo, bo) with weights stored as
    (in, out) and biases as (1, out) / (nb, 1, out). Returns f32 (B, out_dim).
    """
    (w1, b1, w2, b2, wa, ba, wb, bb, wo, bo) = params
    B, in_dim = x.shape
    h1_dim = w1.shape[1]
    res_dim = w2.shape[1]
    nb = wa.shape[0]
    out_dim = wo.shape[1]
    assert nb >= 1, "need at least one residual block"

    # Lane-dense (multiple-of-128) feature dims; multiple-of-8 batch tile.
    in_p = _round_up(in_dim, 128)
    h1_p = _round_up(h1_dim, 128)
    res_p = _round_up(res_dim, 128)
    out_p = _round_up(out_dim, 128)

    if batch_tile is None:
        batch_tile = min(256, _round_up(B, 8))    # fill MXU rows when B allows
        # Prefer >=2 batch tiles so the "parallel" axis can use both cores.
        if _round_up(B, batch_tile) // batch_tile < 2 and B >= 16:
            batch_tile = max(8, _round_up(batch_tile // 2, 8))
    tb = max(8, _round_up(min(batch_tile, _round_up(B, 8)), 8))
    B_p = _round_up(B, tb)

    cdt = compute_dtype
    f32 = jnp.float32

    # Zero padding is exact: padded columns stay 0 through ReLU/residual.
    xp = _pad_to(x.astype(cdt), (B_p, in_p))
    w1p = _pad_to(w1.astype(cdt), (in_p, h1_p))
    b1p = _pad_to(b1.astype(f32), (1, h1_p))
    w2p = _pad_to(w2.astype(cdt), (h1_p, res_p))
    b2p = _pad_to(b2.astype(f32), (1, res_p))
    wap = _pad_to(wa.astype(cdt), (nb, res_p, res_p))
    bap = _pad_to(ba.astype(f32), (nb, 1, res_p))
    wbp = _pad_to(wb.astype(cdt), (nb, res_p, res_p))
    bbp = _pad_to(bb.astype(f32), (nb, 1, res_p))
    wop = _pad_to(wo.astype(cdt), (res_p, out_p))
    bop = _pad_to(bo.astype(f32), (1, out_p))

    grid = (B_p // tb, nb)

    # Per-step VMEM residency (x2 for double-buffered streamed weights)
    # + activation scratch, with some headroom.
    csize = np.dtype(cdt).itemsize
    block_bytes = (tb * in_p * csize
                   + in_p * h1_p * csize + h1_p * 4
                   + h1_p * res_p * csize + res_p * 4
                   + 2 * (res_p * res_p * csize + res_p * 4)
                   + res_p * out_p * csize + out_p * 4
                   + tb * out_p * 4)
    vmem_limit = int(min(max(2 * block_bytes + tb * res_p * 4 + (1 << 20),
                             32 << 20), 127 << 20))

    flops = 2 * B_p * (in_p * h1_p + h1_p * res_p
                       + nb * 2 * res_p * res_p + res_p * out_p)
    bytes_accessed = sum(int(a.size) * np.dtype(a.dtype).itemsize for a in
                         (xp, w1p, b1p, w2p, b2p, wap, bap, wbp, bbp, wop, bop))
    bytes_accessed += B_p * out_p * 4

    inv2 = lambda shape: pl.BlockSpec(shape, lambda i, k: (0, 0))       # grid-invariant
    perblk = lambda shape: pl.BlockSpec(shape, lambda i, k: (k, 0, 0))  # streamed per block

    out_full = pl.pallas_call(
        _fc_resnet_kernel,
        out_shape=jax.ShapeDtypeStruct((B_p, out_p), jnp.float32),
        grid_spec=pltpu.PrefetchScalarGridSpec(
            num_scalar_prefetch=0,
            grid=grid,
            in_specs=[
                pl.BlockSpec((tb, in_p), lambda i, k: (i, 0)),   # x
                inv2((in_p, h1_p)),                              # W1
                inv2((1, h1_p)),                                 # b1
                inv2((h1_p, res_p)),                             # W2
                inv2((1, res_p)),                                # b2
                perblk((1, res_p, res_p)),                       # Wa[k]
                perblk((1, 1, res_p)),                           # ba[k]
                perblk((1, res_p, res_p)),                       # Wb[k]
                perblk((1, 1, res_p)),                           # bb[k]
                inv2((res_p, out_p)),                            # Wo
                inv2((1, out_p)),                                # bo
            ],
            out_specs=pl.BlockSpec((tb, out_p), lambda i, k: (i, 0)),
            scratch_shapes=[pltpu.VMEM((tb, res_p), jnp.float32)],
        ),
        compiler_params=pltpu.CompilerParams(
            dimension_semantics=("parallel", "arbitrary"),
            vmem_limit_bytes=vmem_limit),
        cost_estimate=pl.CostEstimate(
            flops=flops, transcendentals=0, bytes_accessed=bytes_accessed),
    )(xp, w1p, b1p, w2p, b2p, wap, bap, wbp, bbp, wop, bop)

    return out_full[:B, :out_dim]


def init_params(key, input_dim, h1_dim, resnet_dim, num_res_blocks, out_dim):
    """Deterministic synthetic parameters (weights stored as (in, out))."""
    ks = jax.random.split(key, 5)

    def lin(k, fan_in, fan_out):
        scale = 1.0 / jnp.sqrt(jnp.float32(fan_in))
        w = jax.random.uniform(k, (fan_in, fan_out), jnp.float32, -scale, scale)
        b = jax.random.uniform(jax.random.fold_in(k, 1), (1, fan_out),
                               jnp.float32, -scale, scale)
        return w, b

    w1, b1 = lin(ks[0], input_dim, h1_dim)
    w2, b2 = lin(ks[1], h1_dim, resnet_dim)

    wa_l, ba_l, wb_l, bb_l = [], [], [], []
    for blk in range(num_res_blocks):
        wa, ba = lin(jax.random.fold_in(ks[2], blk), resnet_dim, resnet_dim)
        wb, bb = lin(jax.random.fold_in(ks[3], blk), resnet_dim, resnet_dim)
        wa_l.append(wa); ba_l.append(ba); wb_l.append(wb); bb_l.append(bb)
    wa = jnp.stack(wa_l); ba = jnp.stack(ba_l)
    wb = jnp.stack(wb_l); bb = jnp.stack(bb_l)

    wo, bo = lin(ks[4], resnet_dim, out_dim)
    return (w1, b1, w2, b2, wa, ba, wb, bb, wo, bo)


def reference_forward(x, params, compute_dtype=jnp.float32):
    """Pure-JAX reference (casts matmul inputs to compute_dtype, f32 accum)."""
    (w1, b1, w2, b2, wa, ba, wb, bb, wo, bo) = params
    c = compute_dtype
    dot = lambda a, w: jnp.dot(a.astype(c), w.astype(c),
                               preferred_element_type=jnp.float32)
    h = jax.nn.relu(dot(x, w1) + b1)
    h = jax.nn.relu(dot(h, w2) + b2)
    for blk in range(wa.shape[0]):
        y = jax.nn.relu(dot(h, wa[blk]) + ba[blk])
        y = dot(y, wb[blk]) + bb[blk]
        h = jax.nn.relu(h + y)
    return dot(h, wo) + bo


if __name__ == "__main__":
    # Small shapes consistent with the Cube3FCResnet constructor.
    B = 16
    state_dim = 32
    input_dim = 2 * state_dim       # concat(state, goal) encoding -> 64
    h1_dim = 128
    resnet_dim = 128
    num_res_blocks = 2
    out_dim = 12                    # 12 cube moves -> Q-values

    key = jax.random.PRNGKey(0)
    k_x, k_p = jax.random.split(key)
    x = jax.random.uniform(k_x, (B, input_dim), jnp.float32)
    params = init_params(k_p, input_dim, h1_dim, resnet_dim,
                         num_res_blocks, out_dim)

    # batch_tile=8 -> grid=(2, num_res_blocks): >=2 parallel batch steps.
    # 1) f32 compute path: matches the pure-f32 module semantics tightly.
    out_f32 = jax.block_until_ready(
        cube3_fc_resnet_forward(x, params, batch_tile=8,
                                compute_dtype=jnp.float32))
    ref_f32 = reference_forward(x, params, compute_dtype=jnp.float32)
    assert out_f32.shape == (B, out_dim)
    assert jnp.allclose(out_f32, ref_f32, rtol=2e-5, atol=2e-5), \
        "f32 Pallas output mismatch vs JAX reference"

    # 2) default bf16 matmul-input path (f32 accumulation / elementwise).
    out_bf16 = jax.block_until_ready(
        cube3_fc_resnet_forward(x, params, batch_tile=8,
                                compute_dtype=jnp.bfloat16))
    ref_bf16 = reference_forward(x, params, compute_dtype=jnp.bfloat16)
    assert jnp.allclose(out_bf16, ref_bf16, rtol=2e-2, atol=2e-2), \
        "bf16 Pallas output mismatch vs JAX reference"

    print("KERNEL_OK")
</pallas_src>

<mosaic_0001>
module attributes {stable_mosaic.version = 11 : i64} {
  func.func @_fc_resnet_kernel(%arg0: i32, %arg1: i32, %arg2: memref<8x128xf32, #tpu.memory_space<vmem>>, %arg3: memref<128x128xf32, #tpu.memory_space<vmem>>, %arg4: memref<1x128xf32, #tpu.memory_space<vmem>>, %arg5: memref<128x128xf32, #tpu.memory_space<vmem>>, %arg6: memref<1x128xf32, #tpu.memory_space<vmem>>, %arg7: memref<1x128x128xf32, #tpu.memory_space<vmem>>, %arg8: memref<1x1x128xf32, #tpu.memory_space<vmem>>, %arg9: memref<1x128x128xf32, #tpu.memory_space<vmem>>, %arg10: memref<1x1x128xf32, #tpu.memory_space<vmem>>, %arg11: memref<128x128xf32, #tpu.memory_space<vmem>>, %arg12: memref<1x128xf32, #tpu.memory_space<vmem>>, %arg13: memref<8x128xf32, #tpu.memory_space<vmem>>, %arg14: memref<8x128xf32, #tpu.memory_space<vmem>>) attributes {dimension_semantics = [#tpu.dimension_semantics<parallel>, #tpu.dimension_semantics<arbitrary>], iteration_bounds = array<i64: 2, 2>, scalar_prefetch = 0 : i64, scratch_operands = 1 : i64, tpu.core_type = #tpu.core_type<tc>, window_params = [{transform_indices = @transform_0, window_bounds = array<i64: 8, 128>}, {pipeline_mode = #tpu.pipeline_mode<synchronous>, transform_indices = @transform_1, window_bounds = array<i64: 128, 128>}, {pipeline_mode = #tpu.pipeline_mode<synchronous>, transform_indices = @transform_2, window_bounds = array<i64: 1, 128>}, {pipeline_mode = #tpu.pipeline_mode<synchronous>, transform_indices = @transform_3, window_bounds = array<i64: 128, 128>}, {pipeline_mode = #tpu.pipeline_mode<synchronous>, transform_indices = @transform_4, window_bounds = array<i64: 1, 128>}, {transform_indices = @transform_5, window_bounds = array<i64: 1, 128, 128>}, {transform_indices = @transform_6, window_bounds = array<i64: 1, 1, 128>}, {transform_indices = @transform_7, window_bounds = array<i64: 1, 128, 128>}, {transform_indices = @transform_8, window_bounds = array<i64: 1, 1, 128>}, {pipeline_mode = #tpu.pipeline_mode<synchronous>, transform_indices = @transform_9, window_bounds = array<i64: 128, 128>}, {pipeline_mode = #tpu.pipeline_mode<synchronous>, transform_indices = @transform_10, window_bounds = array<i64: 1, 128>}, {transform_indices = @transform_11, window_bounds = array<i64: 8, 128>}]} {
    %c0_i32 = arith.constant 0 : i32
    %0 = arith.cmpi eq, %arg1, %c0_i32 : i32
    %1 = arith.extui %0 : i1 to i32
    %c0_i32_0 = arith.constant 0 : i32
    %2 = arith.cmpi ne, %1, %c0_i32_0 : i32
    scf.if %2 {
      %c0_20 = arith.constant 0 : index
      %c0_21 = arith.constant 0 : index
      %27 = vector.load %arg2[%c0_20, %c0_21] : memref<8x128xf32, #tpu.memory_space<vmem>>, vector<8x128xf32>
      %c0_22 = arith.constant 0 : index
      %c0_23 = arith.constant 0 : index
      %28 = vector.load %arg3[%c0_22, %c0_23] : memref<128x128xf32, #tpu.memory_space<vmem>>, vector<128x128xf32>
      %cst_24 = arith.constant dense<0.000000e+00> : vector<8x128xf32>
      %29 = tpu.matmul %27, %28, %cst_24 {dimension_numbers = #tpu.dot_dimension_numbers<[1], [0], [0], [1], [0, 0, 1, 1], [], []>} : vector<8x128xf32>, vector<128x128xf32>, vector<8x128xf32> -> vector<8x128xf32>
      %c0_25 = arith.constant 0 : index
      %c0_26 = arith.constant 0 : index
      %30 = vector.load %arg4[%c0_25, %c0_26] : memref<1x128xf32, #tpu.memory_space<vmem>>, vector<1x128xf32>
      %31 = vector.broadcast %30 : vector<1x128xf32> to vector<8x128xf32>
      %32 = arith.addf %29, %31 : vector<8x128xf32>
      %cst_27 = arith.constant 0.000000e+00 : f32
      %33 = vector.broadcast %cst_27 : f32 to vector<8x128xf32>
      %34 = arith.maximumf %32, %33 : vector<8x128xf32>
      %c0_28 = arith.constant 0 : index
      %c0_29 = arith.constant 0 : index
      %35 = vector.load %arg5[%c0_28, %c0_29] : memref<128x128xf32, #tpu.memory_space<vmem>>, vector<128x128xf32>
      %cst_30 = arith.constant dense<0.000000e+00> : vector<8x128xf32>
      %36 = tpu.matmul %34, %35, %cst_30 {dimension_numbers = #tpu.dot_dimension_numbers<[1], [0], [0], [1], [0, 0, 1, 1], [], []>} : vector<8x128xf32>, vector<128x128xf32>, vector<8x128xf32> -> vector<8x128xf32>
      %c0_31 = arith.constant 0 : index
      %c0_32 = arith.constant 0 : index
      %37 = vector.load %arg6[%c0_31, %c0_32] : memref<1x128xf32, #tpu.memory_space<vmem>>, vector<1x128xf32>
      %38 = vector.broadcast %37 : vector<1x128xf32> to vector<8x128xf32>
      %39 = arith.addf %36, %38 : vector<8x128xf32>
      %cst_33 = arith.constant 0.000000e+00 : f32
      %40 = vector.broadcast %cst_33 : f32 to vector<8x128xf32>
      %41 = arith.maximumf %39, %40 : vector<8x128xf32>
      %c0_34 = arith.constant 0 : index
      %c0_35 = arith.constant 0 : index
      %42 = vector.load %arg14[%c0_34, %c0_35] : memref<8x128xf32, #tpu.memory_space<vmem>>, vector<8x128xf32>
      tpu.vector_store %arg14[%c0_34, %c0_35], %41 {strides = array<i32>} : memref<8x128xf32, #tpu.memory_space<vmem>>, vector<8x128xf32>,
    } else {
    }
    %c0 = arith.constant 0 : index
    %c0_1 = arith.constant 0 : index
    %3 = vector.load %arg14[%c0, %c0_1] : memref<8x128xf32, #tpu.memory_space<vmem>>, vector<8x128xf32>
    %c0_2 = arith.constant 0 : index
    %c0_3 = arith.constant 0 : index
    %c0_4 = arith.constant 0 : index
    %4 = vector.load %arg7[%c0_2, %c0_3, %c0_4] : memref<1x128x128xf32, #tpu.memory_space<vmem>>, vector<1x128x128xf32>
    %5 = vector.shape_cast %4 : vector<1x128x128xf32> to vector<128x128xf32>
    %cst = arith.constant dense<0.000000e+00> : vector<8x128xf32>
    %6 = tpu.matmul %3, %5, %cst {dimension_numbers = #tpu.dot_dimension_numbers<[1], [0], [0], [1], [0, 0, 1, 1], [], []>} : vector<8x128xf32>, vector<128x128xf32>, vector<8x128xf32> -> vector<8x128xf32>
    %c0_5 = arith.constant 0 : index
    %c0_6 = arith.constant 0 : index
    %c0_7 = arith.constant 0 : index
    %7 = vector.load %arg8[%c0_5, %c0_6, %c0_7] : memref<1x1x128xf32, #tpu.memory_space<vmem>>, vector<1x1x128xf32>
    %8 = vector.shape_cast %7 : vector<1x1x128xf32> to vector<1x128xf32>
    %9 = vector.broadcast %8 : vector<1x128xf32> to vector<8x128xf32>
    %10 = arith.addf %6, %9 : vector<8x128xf32>
    %cst_8 = arith.constant 0.000000e+00 : f32
    %11 = vector.broadcast %cst_8 : f32 to vector<8x128xf32>
    %12 = arith.maximumf %10, %11 : vector<8x128xf32>
    %c0_9 = arith.constant 0 : index
    %c0_10 = arith.constant 0 : index
    %c0_11 = arith.constant 0 : index
    %13 = vector.load %arg9[%c0_9, %c0_10, %c0_11] : memref<1x128x128xf32, #tpu.memory_space<vmem>>, vector<1x128x128xf32>
    %14 = vector.shape_cast %13 : vector<1x128x128xf32> to vector<128x128xf32>
    %cst_12 = arith.constant dense<0.000000e+00> : vector<8x128xf32>
    %15 = tpu.matmul %12, %14, %cst_12 {dimension_numbers = #tpu.dot_dimension_numbers<[1], [0], [0], [1], [0, 0, 1, 1], [], []>} : vector<8x128xf32>, vector<128x128xf32>, vector<8x128xf32> -> vector<8x128xf32>
    %c0_13 = arith.constant 0 : index
    %c0_14 = arith.constant 0 : index
    %c0_15 = arith.constant 0 : index
    %16 = vector.load %arg10[%c0_13, %c0_14, %c0_15] : memref<1x1x128xf32, #tpu.memory_space<vmem>>, vector<1x1x128xf32>
    %17 = vector.shape_cast %16 : vector<1x1x128xf32> to vector<1x128xf32>
    %18 = vector.broadcast %17 : vector<1x128xf32> to vector<8x128xf32>
    %19 = arith.addf %15, %18 : vector<8x128xf32>
    %20 = arith.addf %3, %19 : vector<8x128xf32>
    %cst_16 = arith.constant 0.000000e+00 : f32
    %21 = vector.broadcast %cst_16 : f32 to vector<8x128xf32>
    %22 = arith.maximumf %20, %21 : vector<8x128xf32>
    %c0_17 = arith.constant 0 : index
    %c0_18 = arith.constant 0 : index
    %23 = vector.load %arg14[%c0_17, %c0_18] : memref<8x128xf32, #tpu.memory_space<vmem>>, vector<8x128xf32>
    tpu.vector_store %arg14[%c0_17, %c0_18], %22 {strides = array<i32>} : memref<8x128xf32, #tpu.memory_space<vmem>>, vector<8x128xf32>,
    %c1_i32 = arith.constant 1 : i32
    %24 = arith.cmpi eq, %arg1, %c1_i32 : i32
    %25 = arith.extui %24 : i1 to i32
    %c0_i32_19 = arith.constant 0 : i32
    %26 = arith.cmpi ne, %25, %c0_i32_19 : i32
    scf.if %26 {
      %c0_20 = arith.constant 0 : index
      %c0_21 = arith.constant 0 : index
      %27 = vector.load %arg11[%c0_20, %c0_21] : memref<128x128xf32, #tpu.memory_space<vmem>>, vector<128x128xf32>
      %cst_22 = arith.constant dense<0.000000e+00> : vector<8x128xf32>
      %28 = tpu.matmul %22, %27, %cst_22 {dimension_numbers = #tpu.dot_dimension_numbers<[1], [0], [0], [1], [0, 0, 1, 1], [], []>} : vector<8x128xf32>, vector<128x128xf32>, vector<8x128xf32> -> vector<8x128xf32>
      %c0_23 = arith.constant 0 : index
      %c0_24 = arith.constant 0 : index
      %29 = vector.load %arg12[%c0_23, %c0_24] : memref<1x128xf32, #tpu.memory_space<vmem>>, vector<1x128xf32>
      %30 = vector.broadcast %29 : vector<1x128xf32> to vector<8x128xf32>
      %31 = arith.addf %28, %30 : vector<8x128xf32>
      %c0_25 = arith.constant 0 : index
      %c0_26 = arith.constant 0 : index
      %32 = vector.load %arg13[%c0_25, %c0_26] : memref<8x128xf32, #tpu.memory_space<vmem>>, vector<8x128xf32>
      tpu.vector_store %arg13[%c0_25, %c0_26], %31 {strides = array<i32>} : memref<8x128xf32, #tpu.memory_space<vmem>>, vector<8x128xf32>,
    } else {
    }
    return
  }
  func.func @transform_0(%arg0: i32, %arg1: i32) -> (i32, i32) {
    %c0_i32 = arith.constant 0 : i32
    %c0_i32_0 = arith.constant 0 : i32
    return %arg0, %c0_i32 : i32, i32
  }
  func.func @transform_1(%arg0: i32, %arg1: i32) -> (i32, i32) {
    %c0_i32 = arith.constant 0 : i32
    %c0_i32_0 = arith.constant 0 : i32
    %c0_i32_1 = arith.constant 0 : i32
    return %c0_i32, %c0_i32_0 : i32, i32
  }
  func.func @transform_2(%arg0: i32, %arg1: i32) -> (i32, i32) {
    %c0_i32 = arith.constant 0 : i32
    %c0_i32_0 = arith.constant 0 : i32
    %c0_i32_1 = arith.constant 0 : i32
    return %c0_i32, %c0_i32_0 : i32, i32
  }
  func.func @transform_3(%arg0: i32, %arg1: i32) -> (i32, i32) {
    %c0_i32 = arith.constant 0 : i32
    %c0_i32_0 = arith.constant 0 : i32
    %c0_i32_1 = arith.constant 0 : i32
    return %c0_i32, %c0_i32_0 : i32, i32
  }
  func.func @transform_4(%arg0: i32, %arg1: i32) -> (i32, i32) {
    %c0_i32 = arith.constant 0 : i32
    %c0_i32_0 = arith.constant 0 : i32
    %c0_i32_1 = arith.constant 0 : i32
    return %c0_i32, %c0_i32_0 : i32, i32
  }
  func.func @transform_5(%arg0: i32, %arg1: i32) -> (i32, i32, i32) {
    %c0_i32 = arith.constant 0 : i32
    %c0_i32_0 = arith.constant 0 : i32
    %c0_i32_1 = arith.constant 0 : i32
    return %arg1, %c0_i32, %c0_i32_0 : i32, i32, i32
  }
  func.func @transform_6(%arg0: i32, %arg1: i32) -> (i32, i32, i32) {
    %c0_i32 = arith.constant 0 : i32
    %c0_i32_0 = arith.constant 0 : i32
    %c0_i32_1 = arith.constant 0 : i32
    return %arg1, %c0_i32, %c0_i32_0 : i32, i32, i32
  }
  func.func @transform_7(%arg0: i32, %arg1: i32) -> (i32, i32, i32) {
    %c0_i32 = arith.constant 0 : i32
    %c0_i32_0 = arith.constant 0 : i32
    %c0_i32_1 = arith.constant 0 : i32
    return %arg1, %c0_i32, %c0_i32_0 : i32, i32, i32
  }
  func.func @transform_8(%arg0: i32, %arg1: i32) -> (i32, i32, i32) {
    %c0_i32 = arith.constant 0 : i32
    %c0_i32_0 = arith.constant 0 : i32
    %c0_i32_1 = arith.constant 0 : i32
    return %arg1, %c0_i32, %c0_i32_0 : i32, i32, i32
  }
  func.func @transform_9(%arg0: i32, %arg1: i32) -> (i32, i32) {
    %c0_i32 = arith.constant 0 : i32
    %c0_i32_0 = arith.constant 0 : i32
    %c0_i32_1 = arith.constant 0 : i32
    return %c0_i32, %c0_i32_0 : i32, i32
  }
  func.func @transform_10(%arg0: i32, %arg1: i32) -> (i32, i32) {
    %c0_i32 = arith.constant 0 : i32
    %c0_i32_0 = arith.constant 0 : i32
    %c0_i32_1 = arith.constant 0 : i32
    return %c0_i32, %c0_i32_0 : i32, i32
  }
  func.func @transform_11(%arg0: i32, %arg1: i32) -> (i32, i32) {
    %c0_i32 = arith.constant 0 : i32
    %c0_i32_0 = arith.constant 0 : i32
    return %arg0, %c0_i32 : i32, i32
  }
}

</mosaic_0001>

<llo_original>
// kernel: tpu_custom_call.1
$region0: #{tpu_custom_call.1}
  #allocation0 [shape = 'u32[]', space=smem, size = 0x4, offset = 0x4, fixed_abs, tag = 'smem constant byte address 0x4 - core index']
  #allocation1 [shape = 'u32[144,128]{1,0:T(1,128)}', space=vmem, size = 0x12000, scoped, tag = 'internal scratch']
  #allocation2 [shape = 'f32[8,128]{1,0:T(8,128)}', space=vmem, size = 0x1000, scoped, tag = 'scratch operand']
  %s0 = inlined_call_operand.hbm [shape: f32[16,128], index: 0, kind: input, shape index: {}]
  %s1 = inlined_call_operand.hbm [shape: f32[128,128], index: 1, kind: input, shape index: {}]
  %s2 = inlined_call_operand.vmem [shape: f32[1,128], index: 2, kind: input, shape index: {}]
  %s3 = inlined_call_operand.hbm [shape: f32[128,128], index: 3, kind: input, shape index: {}]
  %s4 = inlined_call_operand.vmem [shape: f32[1,128], index: 4, kind: input, shape index: {}]
  %s5 = inlined_call_operand.hbm [shape: f32[2,128,128], index: 5, kind: input, shape index: {}]
  %s6 = inlined_call_operand.vmem [shape: f32[2,1,128], index: 6, kind: input, shape index: {}]
  %s7 = inlined_call_operand.hbm [shape: f32[2,128,128], index: 7, kind: input, shape index: {}]
  %s8 = inlined_call_operand.vmem [shape: f32[2,1,128], index: 8, kind: input, shape index: {}]
  %s9 = inlined_call_operand.hbm [shape: f32[128,128], index: 9, kind: input, shape index: {}]
  %s10 = inlined_call_operand.vmem [shape: f32[1,128], index: 10, kind: input, shape index: {}]
  %s11 = inlined_call_operand.hbm [shape: f32[16,128], index: 11, kind: output, shape index: {}]
  %s12 = sld [smem:[#allocation0]]
  $region109: #{tpu_custom_call.1} parent=0
    _
  %s14 = ssub.s32 1, %s12
  %s15 = scalar_select 0, %s14, %s12
  $region1: #{tpu_custom_call.1} parent=0
    #allocation3 [shape = 'u8[8192]{0}', space=vmem, size = 0x2000, scoped, tag = 'input window, operand 0']
    #allocation4 [shape = 's32[2]{0}', space=sflag, size = 0x8, scoped, tag = 'scoped memory for tpu_custom_call.1']
    #allocation5 [shape = 's32[2]{0}', space=sflag, size = 0x8, scoped, tag = 'scoped memory for tpu_custom_call.1']
    #allocation6 [shape = 'u8[65536]{0}', space=vmem, size = 0x10000, scoped, tag = 'input window, operand 1, single buffered']
    #allocation7 [shape = 's32[1]{0}', space=sflag, size = 0x4, scoped, tag = 'scoped memory for tpu_custom_call.1']
    #allocation8 [shape = 'u8[65536]{0}', space=vmem, size = 0x10000, scoped, tag = 'input window, operand 3, single buffered']
    #allocation9 [shape = 'u8[131072]{0}', space=vmem, size = 0x20000, scoped, tag = 'input window, operand 5']
    #allocation10 [shape = 's32[2]{0}', space=sflag, size = 0x8, scoped, tag = 'scoped memory for tpu_custom_call.1']
    #allocation11 [shape = 'u8[131072]{0}', space=vmem, size = 0x20000, scoped, tag = 'input window, operand 7']
    #allocation12 [shape = 'u8[65536]{0}', space=vmem, size = 0x10000, scoped, tag = 'input window, operand 9, single buffered']
    #allocation13 [shape = 's32[1]{0}', space=sflag, size = 0x4, scoped, tag = 'scoped memory for tpu_custom_call.1']
    #allocation14 [shape = 'u8[8192]{0}', space=vmem, size = 0x2000, scoped, tag = 'output window, operand 0']
    %16 = vsyncpa [#allocation4], 0
    %s17 = scalar_lea.sflag [#allocation4], 1
    %18 = vsyncpa %s17, 0
    %19 = vsyncpa [#allocation7], 0
    %20 = vsyncpa [#allocation10], 0
    %s21 = scalar_lea.sflag [#allocation10], 1
    %22 = vsyncpa %s21, 0
    %23 = vsyncpa [#allocation13], 0
    %24 = vsyncpa [#allocation5], 0
    %s25 = scalar_lea.sflag [#allocation5], 1
    %26 = vsyncpa %s25, 0
    loop: start=0, step=1, limit=6
    $region2: #{tpu_custom_call.1} parent=1 // loop_pre_header
      _
    $region3: #{tpu_custom_call.1} parent=1 // loop_header
      %s28 = sphi 0, %s32
      %p29 = scmp.ge.s32.totalorder %s28, 6
      %s35 = sphi 0, %s47
      %s36 = sphi 0, %s43
      %s37 = sphi 0, %s35
      %s38 = sphi 0, %s36
      %s39 = sphi 0, %s37
      %s40 = sphi 0, %s38
      %s50 = sphi 0, %s52
      %s53 = sphi 0, %s50
      %s54 = sphi 0, %s53
      %s70 = sphi 0, %s54
      %s74 = sphi 0, %s74
      %s76 = sphi 0, %s74
      %s77 = sphi 0, %s76
      %s91 = sphi 0, %s77
      %s95 = sphi 0, %s95
      %s97 = sphi 0, %s95
      %s98 = sphi 0, %s97
      %s112 = sphi 0, %s98
      %s116 = sphi 0, %s116
      %s118 = sphi 0, %s116
      %s119 = sphi 0, %s118
      %s133 = sphi 0, %s119
      %s137 = sphi 0, %s137
      %s139 = sphi 0, %s137
      %s140 = sphi 0, %s139
      %s154 = sphi 0, %s140
      %s160 = sphi 0, %s162
      %s163 = sphi 0, %s160
      %s164 = sphi 0, %s163
      %s180 = sphi 0, %s164
      %s186 = sphi 0, %s188
      %s189 = sphi 0, %s186
      %s190 = sphi 0, %s189
      %s206 = sphi 0, %s190
      %s212 = sphi 0, %s214
      %s215 = sphi 0, %s212
      %s216 = sphi 0, %s215
      %s232 = sphi 0, %s216
      %s238 = sphi 0, %s240
      %s241 = sphi 0, %s238
      %s242 = sphi 0, %s241
      %s258 = sphi 0, %s242
      %s262 = sphi 0, %s262
      %s264 = sphi 0, %s262
      %s265 = sphi 0, %s264
      %s279 = sphi 0, %s265
      %s283 = sphi 0, %s283
      %s285 = sphi 0, %s283
      %s286 = sphi 0, %s285
      %s300 = sphi 0, %s286
      %s306 = sphi 0, %s308
      %s309 = sphi 0, %s306
      %s310 = sphi 0, %s309
      %s326 = sphi 0, %s310
    $region4: #{tpu_custom_call.1} parent=1 // loop_header_branch
      %31 = sbr.rel (%p29) target = $region8
    $region5: #{tpu_custom_call.1} parent=1 // loop_body
      %s33 = ssub.s32 %s28, 1
      %s34 = ssub.s32 %s28, 2
      %s41 = sadd.s32 1, %s36
      %p42 = scmp.ge.s32.totalorder %s41, 2
      %s43 = scalar_select %p42, 0, %s41
      %s44 = sadd.s32 1, %s35
      %s45 = scalar_select %p42, %s44, %s35
      %p46 = scmp.ge.s32.totalorder %s45, 2
      %s47 = scalar_select %p46, 0, %s45
      %s48 = ssub.s32 %s35, %s47
      %p49 = scmp.eq.s32.totalorder %s48, 0
      %s51 = sadd.s32 %s50, 1
      %s52 = scalar_select %p49, %s50, %s51
      %p55 = pneg %p49
      %p56 = scmp.eq.s32.totalorder %s28, 3
      %p57 = por %p55, %p56
      %p58 = scmp.ne.s32.totalorder %s50, %s53
      %p59 = scmp.eq.s32.totalorder %s28, 0
      %p60 = por %p58, %p59
      %p61 = scmp.ne.s32.totalorder %s50, %s53
      %p62 = scmp.eq.s32.totalorder %s33, 3
      %p63 = por %p61, %p62
      %p64 = scmp.ne.s32.totalorder %s53, %s54
      %p65 = scmp.eq.s32.totalorder %s33, 0
      %p66 = por %p64, %p65
      %p67 = scmp.ne.s32.totalorder %s53, %s54
      %p68 = scmp.eq.s32.totalorder %s34, 3
      %p69 = por %p67, %p68
      %p71 = scmp.ne.s32.totalorder %s54, %s70
      %p72 = scmp.eq.s32.totalorder %s34, 0
      %p73 = por %p71, %p72
      %s75 = sadd.s32 %s74, 1
      %p78 = scmp.eq.s32.totalorder %s28, 3
      %p79 = scmp.ne.s32.totalorder %s74, %s76
      %p80 = scmp.eq.s32.totalorder %s28, 0
      %p81 = por %p79, %p80
      %p82 = scmp.ne.s32.totalorder %s74, %s76
      %p83 = scmp.eq.s32.totalorder %s33, 3
      %p84 = por %p82, %p83
      %p85 = scmp.ne.s32.totalorder %s76, %s77
      %p86 = scmp.eq.s32.totalorder %s33, 0
      %p87 = por %p85, %p86
      %p88 = scmp.ne.s32.totalorder %s76, %s77
      %p89 = scmp.eq.s32.totalorder %s34, 3
      %p90 = por %p88, %p89
      %p92 = scmp.ne.s32.totalorder %s77, %s91
      %p93 = scmp.eq.s32.totalorder %s34, 0
      %p94 = por %p92, %p93
      %s96 = sadd.s32 %s95, 1
      %p99 = scmp.eq.s32.totalorder %s28, 3
      %p100 = scmp.ne.s32.totalorder %s95, %s97
      %p101 = scmp.eq.s32.totalorder %s28, 0
      %p102 = por %p100, %p101
      %p103 = scmp.ne.s32.totalorder %s95, %s97
      %p104 = scmp.eq.s32.totalorder %s33, 3
      %p105 = por %p103, %p104
      %p106 = scmp.ne.s32.totalorder %s97, %s98
      %p107 = scmp.eq.s32.totalorder %s33, 0
      %p108 = por %p106, %p107
      %p109 = scmp.ne.s32.totalorder %s97, %s98
      %p110 = scmp.eq.s32.totalorder %s34, 3
      %p111 = por %p109, %p110
      %p113 = scmp.ne.s32.totalorder %s98, %s112
      %p114 = scmp.eq.s32.totalorder %s34, 0
      %p115 = por %p113, %p114
      %s117 = sadd.s32 %s116, 1
      %p120 = scmp.eq.s32.totalorder %s28, 3
      %p121 = scmp.ne.s32.totalorder %s116, %s118
      %p122 = scmp.eq.s32.totalorder %s28, 0
      %p123 = por %p121, %p122
      %p124 = scmp.ne.s32.totalorder %s116, %s118
      %p125 = scmp.eq.s32.totalorder %s33, 3
      %p126 = por %p124, %p125
      %p127 = scmp.ne.s32.totalorder %s118, %s119
      %p128 = scmp.eq.s32.totalorder %s33, 0
      %p129 = por %p127, %p128
      %p130 = scmp.ne.s32.totalorder %s118, %s119
      %p131 = scmp.eq.s32.totalorder %s34, 3
      %p132 = por %p130, %p131
      %p134 = scmp.ne.s32.totalorder %s119, %s133
      %p135 = scmp.eq.s32.totalorder %s34, 0
      %p136 = por %p134, %p135
      %s138 = sadd.s32 %s137, 1
      %p141 = scmp.eq.s32.totalorder %s28, 3
      %p142 = scmp.ne.s32.totalorder %s137, %s139
      %p143 = scmp.eq.s32.totalorder %s28, 0
      %p144 = por %p142, %p143
      %p145 = scmp.ne.s32.totalorder %s137, %s139
      %p146 = scmp.eq.s32.totalorder %s33, 3
      %p147 = por %p145, %p146
      %p148 = scmp.ne.s32.totalorder %s139, %s140
      %p149 = scmp.eq.s32.totalorder %s33, 0
      %p150 = por %p148, %p149
      %p151 = scmp.ne.s32.totalorder %s139, %s140
      %p152 = scmp.eq.s32.totalorder %s34, 3
      %p153 = por %p151, %p152
      %p155 = scmp.ne.s32.totalorder %s140, %s154
      %p156 = scmp.eq.s32.totalorder %s34, 0
      %p157 = por %p155, %p156
      %s158 = ssub.s32 %s36, %s43
      %p159 = scmp.eq.s32.totalorder %s158, 0
      %s161 = sadd.s32 %s160, 1
      %s162 = scalar_select %p159, %s160, %s161
      %p165 = pneg %p159
      %p166 = scmp.eq.s32.totalorder %s28, 3
      %p167 = por %p165, %p166
      %p168 = scmp.ne.s32.totalorder %s160, %s163
      %p169 = scmp.eq.s32.totalorder %s28, 0
      %p170 = por %p168, %p169
      %p171 = scmp.ne.s32.totalorder %s160, %s163
      %p172 = scmp.eq.s32.totalorder %s33, 3
      %p173 = por %p171, %p172
      %p174 = scmp.ne.s32.totalorder %s163, %s164
      %p175 = scmp.eq.s32.totalorder %s33, 0
      %p176 = por %p174, %p175
      %p177 = scmp.ne.s32.totalorder %s163, %s164
      %p178 = scmp.eq.s32.totalorder %s34, 3
      %p179 = por %p177, %p178
      %p181 = scmp.ne.s32.totalorder %s164, %s180
      %p182 = scmp.eq.s32.totalorder %s34, 0
      %p183 = por %p181, %p182
      %s184 = ssub.s32 %s36, %s43
      %p185 = scmp.eq.s32.totalorder %s184, 0
      %s187 = sadd.s32 %s186, 1
      %s188 = scalar_select %p185, %s186, %s187
      %p191 = pneg %p185
      %p192 = scmp.eq.s32.totalorder %s28, 3
      %p193 = por %p191, %p192
      %p194 = scmp.ne.s32.totalorder %s186, %s189
      %p195 = scmp.eq.s32.totalorder %s28, 0
      %p196 = por %p194, %p195
      %p197 = scmp.ne.s32.totalorder %s186, %s189
      %p198 = scmp.eq.s32.totalorder %s33, 3
      %p199 = por %p197, %p198
      %p200 = scmp.ne.s32.totalorder %s189, %s190
      %p201 = scmp.eq.s32.totalorder %s33, 0
      %p202 = por %p200, %p201
      %p203 = scmp.ne.s32.totalorder %s189, %s190
      %p204 = scmp.eq.s32.totalorder %s34, 3
      %p205 = por %p203, %p204
      %p207 = scmp.ne.s32.totalorder %s190, %s206
      %p208 = scmp.eq.s32.totalorder %s34, 0
      %p209 = por %p207, %p208
      %s210 = ssub.s32 %s36, %s43
      %p211 = scmp.eq.s32.totalorder %s210, 0
      %s213 = sadd.s32 %s212, 1
      %s214 = scalar_select %p211, %s212, %s213
      %p217 = pneg %p211
      %p218 = scmp.eq.s32.totalorder %s28, 3
      %p219 = por %p217, %p218
      %p220 = scmp.ne.s32.totalorder %s212, %s215
      %p221 = scmp.eq.s32.totalorder %s28, 0
      %p222 = por %p220, %p221
      %p223 = scmp.ne.s32.totalorder %s212, %s215
      %p224 = scmp.eq.s32.totalorder %s33, 3
      %p225 = por %p223, %p224
      %p226 = scmp.ne.s32.totalorder %s215, %s216
      %p227 = scmp.eq.s32.totalorder %s33, 0
      %p228 = por %p226, %p227
      %p229 = scmp.ne.s32.totalorder %s215, %s216
      %p230 = scmp.eq.s32.totalorder %s34, 3
      %p231 = por %p229, %p230
      %p233 = scmp.ne.s32.totalorder %s216, %s232
      %p234 = scmp.eq.s32.totalorder %s34, 0
      %p235 = por %p233, %p234
      %s236 = ssub.s32 %s36, %s43
      %p237 = scmp.eq.s32.totalorder %s236, 0
      %s239 = sadd.s32 %s238, 1
      %s240 = scalar_select %p237, %s238, %s239
      %p243 = pneg %p237
      %p244 = scmp.eq.s32.totalorder %s28, 3
      %p245 = por %p243, %p244
      %p246 = scmp.ne.s32.totalorder %s238, %s241
      %p247 = scmp.eq.s32.totalorder %s28, 0
      %p248 = por %p246, %p247
      %p249 = scmp.ne.s32.totalorder %s238, %s241
      %p250 = scmp.eq.s32.totalorder %s33, 3
      %p251 = por %p249, %p250
      %p252 = scmp.ne.s32.totalorder %s241, %s242
      %p253 = scmp.eq.s32.totalorder %s33, 0
      %p254 = por %p252, %p253
      %p255 = scmp.ne.s32.totalorder %s241, %s242
      %p256 = scmp.eq.s32.totalorder %s34, 3
      %p257 = por %p255, %p256
      %p259 = scmp.ne.s32.totalorder %s242, %s258
      %p260 = scmp.eq.s32.totalorder %s34, 0
      %p261 = por %p259, %p260
      %s263 = sadd.s32 %s262, 1
      %p266 = scmp.eq.s32.totalorder %s28, 3
      %p267 = scmp.ne.s32.totalorder %s262, %s264
      %p268 = scmp.eq.s32.totalorder %s28, 0
      %p269 = por %p267, %p268
      %p270 = scmp.ne.s32.totalorder %s262, %s264
      %p271 = scmp.eq.s32.totalorder %s33, 3
      %p272 = por %p270, %p271
      %p273 = scmp.ne.s32.totalorder %s264, %s265
      %p274 = scmp.eq.s32.totalorder %s33, 0
      %p275 = por %p273, %p274
      %p276 = scmp.ne.s32.totalorder %s264, %s265
      %p277 = scmp.eq.s32.totalorder %s34, 3
      %p278 = por %p276, %p277
      %p280 = scmp.ne.s32.totalorder %s265, %s279
      %p281 = scmp.eq.s32.totalorder %s34, 0
      %p282 = por %p280, %p281
      %s284 = sadd.s32 %s283, 1
      %p287 = scmp.eq.s32.totalorder %s28, 3
      %p288 = scmp.ne.s32.totalorder %s283, %s285
      %p289 = scmp.eq.s32.totalorder %s28, 0
      %p290 = por %p288, %p289
      %p291 = scmp.ne.s32.totalorder %s283, %s285
      %p292 = scmp.eq.s32.totalorder %s33, 3
      %p293 = por %p291, %p292
      %p294 = scmp.ne.s32.totalorder %s285, %s286
      %p295 = scmp.eq.s32.totalorder %s33, 0
      %p296 = por %p294, %p295
      %p297 = scmp.ne.s32.totalorder %s285, %s286
      %p298 = scmp.eq.s32.totalorder %s34, 3
      %p299 = por %p297, %p298
      %p301 = scmp.ne.s32.totalorder %s286, %s300
      %p302 = scmp.eq.s32.totalorder %s34, 0
      %p303 = por %p301, %p302
      %s304 = ssub.s32 %s35, %s47
      %p305 = scmp.eq.s32.totalorder %s304, 0
      %s307 = sadd.s32 %s306, 1
      %s308 = scalar_select %p305, %s306, %s307
      %p311 = pneg %p305
      %p312 = scmp.eq.s32.totalorder %s28, 3
      %p313 = por %p311, %p312
      %p314 = scmp.ne.s32.totalorder %s306, %s309
      %p315 = scmp.eq.s32.totalorder %s28, 0
      %p316 = por %p314, %p315
      %p317 = scmp.ne.s32.totalorder %s306, %s309
      %p318 = scmp.eq.s32.totalorder %s33, 3
      %p319 = por %p317, %p318
      %p320 = scmp.ne.s32.totalorder %s309, %s310
      %p321 = scmp.eq.s32.totalorder %s33, 0
      %p322 = por %p320, %p321
      %p323 = scmp.ne.s32.totalorder %s309, %s310
      %p324 = scmp.eq.s32.totalorder %s34, 3
      %p325 = por %p323, %p324
      %p327 = scmp.ne.s32.totalorder %s310, %s326
      %p328 = scmp.eq.s32.totalorder %s34, 0
      %p329 = por %p327, %p328
      %p330 = scmp.le.s32.totalorder 1, %s28
      %p331 = scmp.lt.s32.totalorder %s28, 5
      %p332 = pnand %p330, %p331
      %p333 = pneg %p332
      // Predicated region
      $region9: #{tpu_custom_call.1} parent=5 // pred_check
        _
      $region10: #{tpu_custom_call.1} parent=5 // pred_check_branch
        %335 = sbr.rel (%p332) target = $region12
      $region11: #{tpu_custom_call.1} parent=5 // pred_region
        %s336 = ssub.s32 %s28, 1
        // Predicated region
        $region13: #{tpu_custom_call.1} parent=11 // pred_check
          %p337 = pneg %p87
        $region14: #{tpu_custom_call.1} parent=11 // pred_check_branch
          %339 = sbr.rel (%p337) target = $region16
        $region15: #{tpu_custom_call.1} parent=11 // pred_region
          %s341 = ssub.s32 2048, 2048
          %342 = vsyncadd [#allocation7], %s341
          %s343 = sshll.u32 [#allocation6], 4
          %s344 = int_to_ptr.vmem [resolvable:$true] %s343
          %349 = dma.hbm_to_vmem [thread:$0]  %s1, 2048, %s344, [#allocation7], 128, 128, 8
        $region16: #{tpu_custom_call.1} parent=11 // pred_fallthru
          _
        // Predicated region
        $region17: #{tpu_custom_call.1} parent=11 // pred_check
          %p350 = pneg %p108
        $region18: #{tpu_custom_call.1} parent=11 // pred_check_branch
          %352 = sbr.rel (%p350) target = $region20
        $region19: #{tpu_custom_call.1} parent=11 // pred_region
          _
        $region20: #{tpu_custom_call.1} parent=11 // pred_fallthru
          _
        // Predicated region
        $region21: #{tpu_custom_call.1} parent=11 // pred_check
          %p353 = pneg %p129
        $region22: #{tpu_custom_call.1} parent=11 // pred_check_branch
          %355 = sbr.rel (%p353) target = $region24
        $region23: #{tpu_custom_call.1} parent=11 // pred_region
          %s357 = ssub.s32 2048, 2048
          %358 = vsyncadd [#allocation7], %s357
          %s359 = sshll.u32 [#allocation8], 4
          %s360 = int_to_ptr.vmem [resolvable:$true] %s359
          %365 = dma.hbm_to_vmem [thread:$0]  %s3, 2048, %s360, [#allocation7], 128, 128, 8
        $region24: #{tpu_custom_call.1} parent=11 // pred_fallthru
          _
        // Predicated region
        $region25: #{tpu_custom_call.1} parent=11 // pred_check
          %p366 = pneg %p150
        $region26: #{tpu_custom_call.1} parent=11 // pred_check_branch
          %368 = sbr.rel (%p366) target = $region28
        $region27: #{tpu_custom_call.1} parent=11 // pred_region
          _
        $region28: #{tpu_custom_call.1} parent=11 // pred_fallthru
          _
        // Predicated region
        $region29: #{tpu_custom_call.1} parent=11 // pred_check
          %p369 = pneg %p275
        $region30: #{tpu_custom_call.1} parent=11 // pred_check_branch
          %371 = sbr.rel (%p369) target = $region32
        $region31: #{tpu_custom_call.1} parent=11 // pred_region
          %s373 = ssub.s32 2048, 2048
          %374 = vsyncadd [#allocation13], %s373
          %s375 = sshll.u32 [#allocation12], 4
          %s376 = int_to_ptr.vmem [resolvable:$true] %s375
          %381 = dma.hbm_to_vmem [thread:$0]  %s9, 2048, %s376, [#allocation13], 128, 128, 8
        $region32: #{tpu_custom_call.1} parent=11 // pred_fallthru
          _
        // Predicated region
        $region33: #{tpu_custom_call.1} parent=11 // pred_check
          %p382 = pneg %p296
        $region34: #{tpu_custom_call.1} parent=11 // pred_check_branch
          %384 = sbr.rel (%p382) target = $region36
        $region35: #{tpu_custom_call.1} parent=11 // pred_region
          _
        $region36: #{tpu_custom_call.1} parent=11 // pred_fallthru
          _
      $region12: #{tpu_custom_call.1} parent=5 // pred_fallthru
        _
      %p385 = scmp.lt.s32.totalorder %s28, 4
      // Predicated region
      $region37: #{tpu_custom_call.1} parent=5 // pred_check
        %p386 = pneg %p385
      $region38: #{tpu_custom_call.1} parent=5 // pred_check_branch
        %388 = sbr.rel (%p386) target = $region40
      $region39: #{tpu_custom_call.1} parent=5 // pred_region
        // Predicated region
        $region41: #{tpu_custom_call.1} parent=39 // pred_check
          %p389 = pneg %p60
        $region42: #{tpu_custom_call.1} parent=39 // pred_check_branch
          %391 = sbr.rel (%p389) target = $region44
        $region43: #{tpu_custom_call.1} parent=39 // pred_region
          %s392 = sand.u32 %s50, 1
          %s393 = scalar_lea.sflag [#allocation4], %s392
          %s394 = sand.u32 %s50, 1
          %s395 = smul.addr %s394, 8
          %s396 = scalar_lea.vmem [#allocation3], %s395
          %s398 = ssub.s32 128, 128
          %399 = vsyncadd %s393, %s398
          %s400 = smul.addr %s35, 128
          %s401 = scalar_lea.hbm %s0, %s400
          %s403 = sshll.u32 %s396, 4
          %s404 = int_to_ptr.vmem [resolvable:$true] %s403
          %406 = dma.hbm_to_vmem [thread:$0]  %s401, 128, %s404, %s393
        $region44: #{tpu_custom_call.1} parent=39 // pred_fallthru
          _
        // Predicated region
        $region45: #{tpu_custom_call.1} parent=39 // pred_check
          %p407 = pneg %p170
        $region46: #{tpu_custom_call.1} parent=39 // pred_check_branch
          %409 = sbr.rel (%p407) target = $region48
        $region47: #{tpu_custom_call.1} parent=39 // pred_region
          %s410 = sand.u32 %s28, 1
          %s411 = scalar_lea.sflag [#allocation10], %s410
          %s412 = sand.u32 %s160, 1
          %s413 = smul.addr %s412, 128
          %s414 = scalar_lea.vmem [#allocation9], %s413
          %s416 = ssub.s32 2048, 2048
          %417 = vsyncadd %s411, %s416
          %s418 = smul.addr %s36, 16
          %s419 = smul.addr %s418, 128
          %s420 = scalar_lea.hbm %s5, %s419
          %s421 = sshll.u32 %s414, 4
          %s422 = int_to_ptr.vmem [resolvable:$true] %s421
          %427 = dma.hbm_to_vmem [thread:$0]  %s420, 2048, %s422, %s411, 128, 128, 8
        $region48: #{tpu_custom_call.1} parent=39 // pred_fallthru
          _
        // Predicated region
        $region49: #{tpu_custom_call.1} parent=39 // pred_check
          %p428 = pneg %p196
        $region50: #{tpu_custom_call.1} parent=39 // pred_check_branch
          %430 = sbr.rel (%p428) target = $region52
        $region51: #{tpu_custom_call.1} parent=39 // pred_region
          %p431 = scmp.lt.s32.totalorder %s36, 1
          %s432 = scalar_select %p431, %s36, 1
          %s433 = scalar_lea.vmem %s6, %s432
        $region52: #{tpu_custom_call.1} parent=39 // pred_fallthru
          _
        // Predicated region
        $region53: #{tpu_custom_call.1} parent=39 // pred_check
          %p434 = pneg %p222
        $region54: #{tpu_custom_call.1} parent=39 // pred_check_branch
          %436 = sbr.rel (%p434) target = $region56
        $region55: #{tpu_custom_call.1} parent=39 // pred_region
          %s437 = sand.u32 %s28, 1
          %s438 = scalar_lea.sflag [#allocation10], %s437
          %s439 = sand.u32 %s212, 1
          %s440 = smul.addr %s439, 128
          %s441 = scalar_lea.vmem [#allocation11], %s440
          %s443 = ssub.s32 2048, 2048
          %444 = vsyncadd %s438, %s443
          %s445 = smul.addr %s36, 16
          %s446 = smul.addr %s445, 128
          %s447 = scalar_lea.hbm %s7, %s446
          %s448 = sshll.u32 %s441, 4
          %s449 = int_to_ptr.vmem [resolvable:$true] %s448
          %454 = dma.hbm_to_vmem [thread:$0]  %s447, 2048, %s449, %s438, 128, 128, 8
        $region56: #{tpu_custom_call.1} parent=39 // pred_fallthru
          _
        // Predicated region
        $region57: #{tpu_custom_call.1} parent=39 // pred_check
          %p455 = pneg %p248
        $region58: #{tpu_custom_call.1} parent=39 // pred_check_branch
          %457 = sbr.rel (%p455) target = $region60
        $region59: #{tpu_custom_call.1} parent=39 // pred_region
          %p458 = scmp.lt.s32.totalorder %s36, 1
          %s459 = scalar_select %p458, %s36, 1
          %s460 = scalar_lea.vmem %s8, %s459
        $region60: #{tpu_custom_call.1} parent=39 // pred_fallthru
          _
      $region40: #{tpu_custom_call.1} parent=5 // pred_fallthru
        _
      %p461 = scmp.le.s32.totalorder 1, %s28
      %p462 = scmp.lt.s32.totalorder %s28, 5
      %p463 = pnand %p461, %p462
      %p464 = pneg %p463
      // Predicated region
      $region61: #{tpu_custom_call.1} parent=5 // pred_check
        _
      $region62: #{tpu_custom_call.1} parent=5 // pred_check_branch
        %466 = sbr.rel (%p463) target = $region64
      $region63: #{tpu_custom_call.1} parent=5 // pred_region
        %s467 = ssub.s32 %s28, 1
        %s468 = sand.u32 %s53, 1
        %s469 = scalar_lea.sflag [#allocation4], %s468
        %s470 = sand.u32 %s53, 1
        %s471 = smul.addr %s470, 8
        %s472 = scalar_lea.vmem [#allocation3], %s471
        // Predicated region
        $region65: #{tpu_custom_call.1} parent=63 // pred_check
          %p473 = pneg %p66
        $region66: #{tpu_custom_call.1} parent=63 // pred_check_branch
          %475 = sbr.rel (%p473) target = $region68
        $region67: #{tpu_custom_call.1} parent=63 // pred_region
          %476 = dma.done %s469, 128
        $region68: #{tpu_custom_call.1} parent=63 // pred_fallthru
          _
        // Predicated region
        $region69: #{tpu_custom_call.1} parent=63 // pred_check
          %p477 = pneg %p87
        $region70: #{tpu_custom_call.1} parent=63 // pred_check_branch
          %479 = sbr.rel (%p477) target = $region72
        $region71: #{tpu_custom_call.1} parent=63 // pred_region
          %480 = dma.done [#allocation7], 2048
        $region72: #{tpu_custom_call.1} parent=63 // pred_fallthru
          _
        // Predicated region
        $region73: #{tpu_custom_call.1} parent=63 // pred_check
          %p481 = pneg %p129
        $region74: #{tpu_custom_call.1} parent=63 // pred_check_branch
          %483 = sbr.rel (%p481) target = $region76
        $region75: #{tpu_custom_call.1} parent=63 // pred_region
          %484 = dma.done [#allocation7], 2048
        $region76: #{tpu_custom_call.1} parent=63 // pred_fallthru
          _
        %s485 = sand.u32 %s33, 1
        %s486 = scalar_lea.sflag [#allocation10], %s485
        %s487 = sand.u32 %s163, 1
        %s488 = smul.addr %s487, 128
        %s489 = scalar_lea.vmem [#allocation9], %s488
        // Predicated region
        $region77: #{tpu_custom_call.1} parent=63 // pred_check
          %p490 = pneg %p176
        $region78: #{tpu_custom_call.1} parent=63 // pred_check_branch
          %492 = sbr.rel (%p490) target = $region80
        $region79: #{tpu_custom_call.1} parent=63 // pred_region
          %493 = dma.done %s486, 2048
        $region80: #{tpu_custom_call.1} parent=63 // pred_fallthru
          _
        %s494 = sand.u32 %s33, 1
        %s495 = scalar_lea.sflag [#allocation10], %s494
        %s496 = sand.u32 %s215, 1
        %s497 = smul.addr %s496, 128
        %s498 = scalar_lea.vmem [#allocation11], %s497
        // Predicated region
        $region81: #{tpu_custom_call.1} parent=63 // pred_check
          %p499 = pneg %p228
        $region82: #{tpu_custom_call.1} parent=63 // pred_check_branch
          %501 = sbr.rel (%p499) target = $region84
        $region83: #{tpu_custom_call.1} parent=63 // pred_region
          %502 = dma.done %s495, 2048
        $region84: #{tpu_custom_call.1} parent=63 // pred_fallthru
          _
        // Predicated region
        $region85: #{tpu_custom_call.1} parent=63 // pred_check
          %p503 = pneg %p275
        $region86: #{tpu_custom_call.1} parent=63 // pred_check_branch
          %505 = sbr.rel (%p503) target = $region88
        $region87: #{tpu_custom_call.1} parent=63 // pred_region
          %506 = dma.done [#allocation13], 2048
        $region88: #{tpu_custom_call.1} parent=63 // pred_fallthru
          _
        %s507 = sand.u32 %s53, 1
        %s508 = scalar_lea.sflag [#allocation4], %s507
        %s509 = sand.u32 %s53, 1
        %s510 = smul.addr %s509, 8
        %s511 = scalar_lea.vmem [#allocation3], %s510
        %p512 = pneg %p66
        %p513 = pneg %p63
        %p514 = pneg %p87
        %p515 = pneg %p84
        %p516 = pneg %p108
        %p517 = pneg %p105
        %p518 = pneg %p129
        %p519 = pneg %p126
        %p520 = pneg %p150
        %p521 = pneg %p147
        %s522 = sand.u32 %s33, 1
        %s523 = scalar_lea.sflag [#allocation10], %s522
        %s524 = sand.u32 %s163, 1
        %s525 = smul.addr %s524, 128
        %s526 = scalar_lea.vmem [#allocation9], %s525
        %p527 = pneg %p176
        %p528 = pneg %p173
        %p529 = scmp.lt.s32.totalorder %s38, 1
        %s530 = scalar_select %p529, %s38, 1
        %s531 = scalar_lea.vmem %s6, %s530
        %p532 = pneg %p202
        %p533 = pneg %p199
        %s534 = sand.u32 %s33, 1
        %s535 = scalar_lea.sflag [#allocation10], %s534
        %s536 = sand.u32 %s215, 1
        %s537 = smul.addr %s536, 128
        %s538 = scalar_lea.vmem [#allocation11], %s537
        %p539 = pneg %p228
        %p540 = pneg %p225
        %p541 = scmp.lt.s32.totalorder %s38, 1
        %s542 = scalar_select %p541, %s38, 1
        %s543 = scalar_lea.vmem %s8, %s542
        %p544 = pneg %p254
        %p545 = pneg %p251
        %p546 = pneg %p275
        %p547 = pneg %p272
        %p548 = pneg %p296
        %p549 = pneg %p293
        %p550 = pneg %p322
        %p551 = pneg %p319
        %s552 = sand.u32 %s309, 1
        %s553 = scalar_lea.sflag [#allocation5], %s552
        %s554 = sand.u32 %s309, 1
        %s555 = smul.addr %s554, 8
        %s556 = scalar_lea.vmem [#allocation14], %s555
        %p557 = scmp.lt.s32.totalorder %s38, 1
        %s558 = scalar_select %p557, %s38, 1
        %s559 = scalar_lea.vmem %s6, %s558
        %p560 = scmp.lt.s32.totalorder %s38, 1
        %s561 = scalar_select %p560, %s38, 1
        %s562 = scalar_lea.vmem %s8, %s561
        %p563 = scmp.eq.s32.totalorder %s38, 0
        // Predicated region
        $region89: #{tpu_custom_call.1} parent=63 // pred_check
          %p564 = pneg %p563
        $region90: #{tpu_custom_call.1} parent=63 // pred_check_branch
          %566 = sbr.rel (%p564) target = $region92
        $region91: #{tpu_custom_call.1} parent=63 // pred_region
          %v567 = vld [vmem:[%s472] sm:$0xff]
          %v568 = vld [vmem:[#allocation6] sm:$0xff]
          %v569 = vld [vmem:[#allocation6 + $0x8] sm:$0xff]
          %v570 = vld [vmem:[#allocation6 + $0x10] sm:$0xff]
          %v571 = vld [vmem:[#allocation6 + $0x18] sm:$0xff]
          %v572 = vld [vmem:[#allocation6 + $0x20] sm:$0xff]
          %v573 = vld [vmem:[#allocation6 + $0x28] sm:$0xff]
          %v574 = vld [vmem:[#allocation6 + $0x30] sm:$0xff]
          %v575 = vld [vmem:[#allocation6 + $0x38] sm:$0xff]
          %v576 = vld [vmem:[#allocation6 + $0x40] sm:$0xff]
          %v577 = vld [vmem:[#allocation6 + $0x48] sm:$0xff]
          %v578 = vld [vmem:[#allocation6 + $0x50] sm:$0xff]
          %v579 = vld [vmem:[#allocation6 + $0x58] sm:$0xff]
          %v580 = vld [vmem:[#allocation6 + $0x60] sm:$0xff]
          %v581 = vld [vmem:[#allocation6 + $0x68] sm:$0xff]
          %v582 = vld [vmem:[#allocation6 + $0x70] sm:$0xff]
          %v583 = vld [vmem:[#allocation6 + $0x78] sm:$0xff]
          %v584 = vld [vmem:[%s2] sm:$0x1]
          %v586 = vlaneseq
          %v587 = vshrl.u32 %v586, 7
          %v588 = vsub.s32 0, %v587
          %v589 = vrot.slane %v584, %v588
          %591 = vmatprep.subr.mxu0 0.0
          %592 = vmatpush1.msra.mxu0 %v568
          %593 = vmatprep.subr.mxu0 0.0
          %594 = vmatpush1.msra.mxu0 %v569
          %595 = vmatprep.subr.mxu0 0.0
          %596 = vmatpush1.msra.mxu0 %v570
          %597 = vmatprep.subr.mxu0 0.0
          %598 = vmatpush1.msra.mxu0 %v571
          %599 = vmatprep.subr.mxu0 0.0
          %600 = vmatpush1.msra.mxu0 %v572
          %601 = vmatprep.subr.mxu0 0.0
          %602 = vmatpush1.msra.mxu0 %v573
          %603 = vmatprep.subr.mxu0 0.0
          %604 = vmatpush1.msra.mxu0 %v574
          %605 = vmatprep.subr.mxu0 0.0
          %606 = vmatpush1.msra.mxu0 %v575
          %607 = vmatprep.subr.mxu0 0.0
          %608 = vmatpush1.msra.mxu0 %v576
          %609 = vmatprep.subr.mxu0 0.0
          %610 = vmatpush1.msra.mxu0 %v577
          %611 = vmatprep.subr.mxu0 0.0
          %612 = vmatpush1.msra.mxu0 %v578
          %613 = vmatprep.subr.mxu0 0.0
          %614 = vmatpush1.msra.mxu0 %v579
          %615 = vmatprep.subr.mxu0 0.0
          %616 = vmatpush1.msra.mxu0 %v580
          %617 = vmatprep.subr.mxu0 0.0
          %618 = vmatpush1.msra.mxu0 %v581
          %619 = vmatprep.subr.mxu0 0.0
          %620 = vmatpush1.msra.mxu0 %v582
          %621 = vmatprep.subr.mxu0 0.0
          %622 = vmatpush1.msra.mxu0 %v583
          %623 = vmatprep.subr.mxu0 0.0
          %624 = vmatpush1.msra.mxu0 0.0
          %625 = vmatprep.subr.mxu0 0.0
          %626 = vmatpush1.msra.mxu0 0.0
          %627 = vmatprep.subr.mxu0 0.0
          %628 = vmatpush1.msra.mxu0 0.0
          %629 = vmatprep.subr.mxu0 0.0
          %630 = vmatpush1.msra.mxu0 0.0
          %631 = vmatprep.subr.mxu0 0.0
          %632 = vmatpush1.msra.mxu0 0.0
          %633 = vmatprep.subr.mxu0 0.0
          %634 = vmatpush1.msra.mxu0 0.0
          %635 = vmatprep.subr.mxu0 0.0
          %636 = vmatpush1.msra.mxu0 0.0
          %637 = vmatprep.subr.mxu0 0.0
          %638 = vmatpush1.msra.mxu0 0.0
          %639 = vmatprep.subr.mxu0 0.0
          %640 = vmatpush1.msra.mxu0 0.0
          %641 = vmatprep.subr.mxu0 0.0
          %642 = vmatpush1.msra.mxu0 0.0
          %643 = vmatprep.subr.mxu0 0.0
          %644 = vmatpush1.msra.mxu0 0.0
          %645 = vmatprep.subr.mxu0 0.0
          %646 = vmatpush1.msra.mxu0 0.0
          %647 = vmatprep.subr.mxu0 0.0
          %648 = vmatpush1.msra.mxu0 0.0
          %649 = vmatprep.subr.mxu0 0.0
          %650 = vmatpush1.msra.mxu0 0.0
          %651 = vmatprep.subr.mxu0 0.0
          %652 = vmatpush1.msra.mxu0 0.0
          %653 = vmatprep.subr.mxu0 0.0
          %654 = vmatpush1.msra.mxu0 0.0
          %655 = vmatprep.mubr.f32.mxu0 0.0
          %656 = vmatmul.mubr.f32.gmra.mrb[0].mxu0 %v567
          %v657 = vpop.f32.mrb[0].mxu0
          %v658 = vadd.f32 %v589, %v657
          %v659 = vpop.f32.mrb[0].mxu0
          %660 = vdwg.mxu0
          %v661 = vmax.f32 %v658, 0.0
          %v662 = vld [vmem:[#allocation8] sm:$0xff]
          %v663 = vld [vmem:[#allocation8 + $0x8] sm:$0xff]
          %v664 = vld [vmem:[#allocation8 + $0x10] sm:$0xff]
          %v665 = vld [vmem:[#allocation8 + $0x18] sm:$0xff]
          %v666 = vld [vmem:[#allocation8 + $0x20] sm:$0xff]
          %v667 = vld [vmem:[#allocation8 + $0x28] sm:$0xff]
          %v668 = vld [vmem:[#allocation8 + $0x30] sm:$0xff]
          %v669 = vld [vmem:[#allocation8 + $0x38] sm:$0xff]
          %v670 = vld [vmem:[#allocation8 + $0x40] sm:$0xff]
          %v671 = vld [vmem:[#allocation8 + $0x48] sm:$0xff]
          %v672 = vld [vmem:[#allocation8 + $0x50] sm:$0xff]
          %v673 = vld [vmem:[#allocation8 + $0x58] sm:$0xff]
          %v674 = vld [vmem:[#allocation8 + $0x60] sm:$0xff]
          %v675 = vld [vmem:[#allocation8 + $0x68] sm:$0xff]
          %v676 = vld [vmem:[#allocation8 + $0x70] sm:$0xff]
          %v677 = vld [vmem:[#allocation8 + $0x78] sm:$0xff]
          %v678 = vld [vmem:[%s4] sm:$0x1]
          %v680 = vlaneseq
          %v681 = vshrl.u32 %v680, 7
          %v682 = vsub.s32 0, %v681
          %v683 = vrot.slane %v678, %v682
          %685 = vmatprep.subr.mxu0 0.0
          %686 = vmatpush1.msra.mxu0 %v662
          %687 = vmatprep.subr.mxu0 0.0
          %688 = vmatpush1.msra.mxu0 %v663
          %689 = vmatprep.subr.mxu0 0.0
          %690 = vmatpush1.msra.mxu0 %v664
          %691 = vmatprep.subr.mxu0 0.0
          %692 = vmatpush1.msra.mxu0 %v665
          %693 = vmatprep.subr.mxu0 0.0
          %694 = vmatpush1.msra.mxu0 %v666
          %695 = vmatprep.subr.mxu0 0.0
          %696 = vmatpush1.msra.mxu0 %v667
          %697 = vmatprep.subr.mxu0 0.0
          %698 = vmatpush1.msra.mxu0 %v668
          %699 = vmatprep.subr.mxu0 0.0
          %700 = vmatpush1.msra.mxu0 %v669
          %701 = vmatprep.subr.mxu0 0.0
          %702 = vmatpush1.msra.mxu0 %v670
          %703 = vmatprep.subr.mxu0 0.0
          %704 = vmatpush1.msra.mxu0 %v671
          %705 = vmatprep.subr.mxu0 0.0
          %706 = vmatpush1.msra.mxu0 %v672
          %707 = vmatprep.subr.mxu0 0.0
          %708 = vmatpush1.msra.mxu0 %v673
          %709 = vmatprep.subr.mxu0 0.0
          %710 = vmatpush1.msra.mxu0 %v674
          %711 = vmatprep.subr.mxu0 0.0
          %712 = vmatpush1.msra.mxu0 %v675
          %713 = vmatprep.subr.mxu0 0.0
          %714 = vmatpush1.msra.mxu0 %v676
          %715 = vmatprep.subr.mxu0 0.0
          %716 = vmatpush1.msra.mxu0 %v677
          %717 = vmatprep.subr.mxu0 0.0
          %718 = vmatpush1.msra.mxu0 0.0
          %719 = vmatprep.subr.mxu0 0.0
          %720 = vmatpush1.msra.mxu0 0.0
          %721 = vmatprep.subr.mxu0 0.0
          %722 = vmatpush1.msra.mxu0 0.0
          %723 = vmatprep.subr.mxu0 0.0
          %724 = vmatpush1.msra.mxu0 0.0
          %725 = vmatprep.subr.mxu0 0.0
          %726 = vmatpush1.msra.mxu0 0.0
          %727 = vmatprep.subr.mxu0 0.0
          %728 = vmatpush1.msra.mxu0 0.0
          %729 = vmatprep.subr.mxu0 0.0
          %730 = vmatpush1.msra.mxu0 0.0
          %731 = vmatprep.subr.mxu0 0.0
          %732 = vmatpush1.msra.mxu0 0.0
          %733 = vmatprep.subr.mxu0 0.0
          %734 = vmatpush1.msra.mxu0 0.0
          %735 = vmatprep.subr.mxu0 0.0
          %736 = vmatpush1.msra.mxu0 0.0
          %737 = vmatprep.subr.mxu0 0.0
          %738 = vmatpush1.msra.mxu0 0.0
          %739 = vmatprep.subr.mxu0 0.0
          %740 = vmatpush1.msra.mxu0 0.0
          %741 = vmatprep.subr.mxu0 0.0
          %742 = vmatpush1.msra.mxu0 0.0
          %743 = vmatprep.subr.mxu0 0.0
          %744 = vmatpush1.msra.mxu0 0.0
          %745 = vmatprep.subr.mxu0 0.0
          %746 = vmatpush1.msra.mxu0 0.0
          %747 = vmatprep.subr.mxu0 0.0
          %748 = vmatpush1.msra.mxu0 0.0
          %749 = vmatprep.mubr.f32.mxu0 0.0
          %750 = vmatmul.mubr.f32.gmra.mrb[0].mxu0 %v661
          %v751 = vpop.f32.mrb[0].mxu0
          %v752 = vadd.f32 %v683, %v751
          %v753 = vpop.f32.mrb[0].mxu0
          %754 = vdwg.mxu0
          %v755 = vmax.f32 %v752, 0.0
          %756 = vst [vmem:[#allocation2] sm:$0xff] %v755
        $region92: #{tpu_custom_call.1} parent=63 // pred_fallthru
          _
        %v757 = vld [vmem:[#allocation2] sm:$0xff]
        %v758 = vld [vmem:[%s489] sm:$0xff]
        %v759 = vld [vmem:[%s489 + $0x8] sm:$0xff]
        %v760 = vld [vmem:[%s489 + $0x10] sm:$0xff]
        %v761 = vld [vmem:[%s489 + $0x18] sm:$0xff]
        %v762 = vld [vmem:[%s489 + $0x20] sm:$0xff]
        %v763 = vld [vmem:[%s489 + $0x28] sm:$0xff]
        %v764 = vld [vmem:[%s489 + $0x30] sm:$0xff]
        %v765 = vld [vmem:[%s489 + $0x38] sm:$0xff]
        %v766 = vld [vmem:[%s489 + $0x40] sm:$0xff]
        %v767 = vld [vmem:[%s489 + $0x48] sm:$0xff]
        %v768 = vld [vmem:[%s489 + $0x50] sm:$0xff]
        %v769 = vld [vmem:[%s489 + $0x58] sm:$0xff]
        %v770 = vld [vmem:[%s489 + $0x60] sm:$0xff]
        %v771 = vld [vmem:[%s489 + $0x68] sm:$0xff]
        %v772 = vld [vmem:[%s489 + $0x70] sm:$0xff]
        %v773 = vld [vmem:[%s489 + $0x78] sm:$0xff]
        %v774 = vld [vmem:[%s559] sm:$0x1]
        %v776 = vlaneseq
        %v777 = vshrl.u32 %v776, 7
        %v778 = vsub.s32 0, %v777
        %v779 = vrot.slane %v774, %v778
        %781 = vmatprep.subr.mxu0 0.0
        %782 = vmatpush1.msra.mxu0 %v758
        %783 = vmatprep.subr.mxu0 0.0
        %784 = vmatpush1.msra.mxu0 %v759
        %785 = vmatprep.subr.mxu0 0.0
        %786 = vmatpush1.msra.mxu0 %v760
        %787 = vmatprep.subr.mxu0 0.0
        %788 = vmatpush1.msra.mxu0 %v761
        %789 = vmatprep.subr.mxu0 0.0
        %790 = vmatpush1.msra.mxu0 %v762
        %791 = vmatprep.subr.mxu0 0.0
        %792 = vmatpush1.msra.mxu0 %v763
        %793 = vmatprep.subr.mxu0 0.0
        %794 = vmatpush1.msra.mxu0 %v764
        %795 = vmatprep.subr.mxu0 0.0
        %796 = vmatpush1.msra.mxu0 %v765
        %797 = vmatprep.subr.mxu0 0.0
        %798 = vmatpush1.msra.mxu0 %v766
        %799 = vmatprep.subr.mxu0 0.0
        %800 = vmatpush1.msra.mxu0 %v767
        %801 = vmatprep.subr.mxu0 0.0
        %802 = vmatpush1.msra.mxu0 %v768
        %803 = vmatprep.subr.mxu0 0.0
        %804 = vmatpush1.msra.mxu0 %v769
        %805 = vmatprep.subr.mxu0 0.0
        %806 = vmatpush1.msra.mxu0 %v770
        %807 = vmatprep.subr.mxu0 0.0
        %808 = vmatpush1.msra.mxu0 %v771
        %809 = vmatprep.subr.mxu0 0.0
        %810 = vmatpush1.msra.mxu0 %v772
        %811 = vmatprep.subr.mxu0 0.0
        %812 = vmatpush1.msra.mxu0 %v773
        %813 = vmatprep.subr.mxu0 0.0
        %814 = vmatpush1.msra.mxu0 0.0
        %815 = vmatprep.subr.mxu0 0.0
        %816 = vmatpush1.msra.mxu0 0.0
        %817 = vmatprep.subr.mxu0 0.0
        %818 = vmatpush1.msra.mxu0 0.0
        %819 = vmatprep.subr.mxu0 0.0
        %820 = vmatpush1.msra.mxu0 0.0
        %821 = vmatprep.subr.mxu0 0.0
        %822 = vmatpush1.msra.mxu0 0.0
        %823 = vmatprep.subr.mxu0 0.0
        %824 = vmatpush1.msra.mxu0 0.0
        %825 = vmatprep.subr.mxu0 0.0
        %826 = vmatpush1.msra.mxu0 0.0
        %827 = vmatprep.subr.mxu0 0.0
        %828 = vmatpush1.msra.mxu0 0.0
        %829 = vmatprep.subr.mxu0 0.0
        %830 = vmatpush1.msra.mxu0 0.0
        %831 = vmatprep.subr.mxu0 0.0
        %832 = vmatpush1.msra.mxu0 0.0
        %833 = vmatprep.subr.mxu0 0.0
        %834 = vmatpush1.msra.mxu0 0.0
        %835 = vmatprep.subr.mxu0 0.0
        %836 = vmatpush1.msra.mxu0 0.0
        %837 = vmatprep.subr.mxu0 0.0
        %838 = vmatpush1.msra.mxu0 0.0
        %839 = vmatprep.subr.mxu0 0.0
        %840 = vmatpush1.msra.mxu0 0.0
        %841 = vmatprep.subr.mxu0 0.0
        %842 = vmatpush1.msra.mxu0 0.0
        %843 = vmatprep.subr.mxu0 0.0
        %844 = vmatpush1.msra.mxu0 0.0
        %845 = vmatprep.mubr.f32.mxu0 0.0
        %846 = vmatmul.mubr.f32.gmra.mrb[0].mxu0 %v757
        %v847 = vpop.f32.mrb[0].mxu0
        %v848 = vadd.f32 %v779, %v847
        %v849 = vpop.f32.mrb[0].mxu0
        %850 = vdwg.mxu0
        %v851 = vmax.f32 %v848, 0.0
        %v852 = vld [vmem:[%s498] sm:$0xff]
        %v853 = vld [vmem:[%s498 + $0x8] sm:$0xff]
        %v854 = vld [vmem:[%s498 + $0x10] sm:$0xff]
        %v855 = vld [vmem:[%s498 + $0x18] sm:$0xff]
        %v856 = vld [vmem:[%s498 + $0x20] sm:$0xff]
        %v857 = vld [vmem:[%s498 + $0x28] sm:$0xff]
        %v858 = vld [vmem:[%s498 + $0x30] sm:$0xff]
        %v859 = vld [vmem:[%s498 + $0x38] sm:$0xff]
        %v860 = vld [vmem:[%s498 + $0x40] sm:$0xff]
        %v861 = vld [vmem:[%s498 + $0x48] sm:$0xff]
        %v862 = vld [vmem:[%s498 + $0x50] sm:$0xff]
        %v863 = vld [vmem:[%s498 + $0x58] sm:$0xff]
        %v864 = vld [vmem:[%s498 + $0x60] sm:$0xff]
        %v865 = vld [vmem:[%s498 + $0x68] sm:$0xff]
        %v866 = vld [vmem:[%s498 + $0x70] sm:$0xff]
        %v867 = vld [vmem:[%s498 + $0x78] sm:$0xff]
        %v868 = vld [vmem:[%s562] sm:$0x1]
        %v870 = vlaneseq
        %v871 = vshrl.u32 %v870, 7
        %v872 = vsub.s32 0, %v871
        %v873 = vrot.slane %v868, %v872
        %875 = vmatprep.subr.mxu0 0.0
        %876 = vmatpush1.msra.mxu0 %v852
        %877 = vmatprep.subr.mxu0 0.0
        %878 = vmatpush1.msra.mxu0 %v853
        %879 = vmatprep.subr.mxu0 0.0
        %880 = vmatpush1.msra.mxu0 %v854
        %881 = vmatprep.subr.mxu0 0.0
        %882 = vmatpush1.msra.mxu0 %v855
        %883 = vmatprep.subr.mxu0 0.0
        %884 = vmatpush1.msra.mxu0 %v856
        %885 = vmatprep.subr.mxu0 0.0
        %886 = vmatpush1.msra.mxu0 %v857
        %887 = vmatprep.subr.mxu0 0.0
        %888 = vmatpush1.msra.mxu0 %v858
        %889 = vmatprep.subr.mxu0 0.0
        %890 = vmatpush1.msra.mxu0 %v859
        %891 = vmatprep.subr.mxu0 0.0
        %892 = vmatpush1.msra.mxu0 %v860
        %893 = vmatprep.subr.mxu0 0.0
        %894 = vmatpush1.msra.mxu0 %v861
        %895 = vmatprep.subr.mxu0 0.0
        %896 = vmatpush1.msra.mxu0 %v862
        %897 = vmatprep.subr.mxu0 0.0
        %898 = vmatpush1.msra.mxu0 %v863
        %899 = vmatprep.subr.mxu0 0.0
        %900 = vmatpush1.msra.mxu0 %v864
        %901 = vmatprep.subr.mxu0 0.0
        %902 = vmatpush1.msra.mxu0 %v865
        %903 = vmatprep.subr.mxu0 0.0
        %904 = vmatpush1.msra.mxu0 %v866
        %905 = vmatprep.subr.mxu0 0.0
        %906 = vmatpush1.msra.mxu0 %v867
        %907 = vmatprep.subr.mxu0 0.0
        %908 = vmatpush1.msra.mxu0 0.0
        %909 = vmatprep.subr.mxu0 0.0
        %910 = vmatpush1.msra.mxu0 0.0
        %911 = vmatprep.subr.mxu0 0.0
        %912 = vmatpush1.msra.mxu0 0.0
        %913 = vmatprep.subr.mxu0 0.0
        %914 = vmatpush1.msra.mxu0 0.0
        %915 = vmatprep.subr.mxu0 0.0
        %916 = vmatpush1.msra.mxu0 0.0
        %917 = vmatprep.subr.mxu0 0.0
        %918 = vmatpush1.msra.mxu0 0.0
        %919 = vmatprep.subr.mxu0 0.0
        %920 = vmatpush1.msra.mxu0 0.0
        %921 = vmatprep.subr.mxu0 0.0
        %922 = vmatpush1.msra.mxu0 0.0
        %923 = vmatprep.subr.mxu0 0.0
        %924 = vmatpush1.msra.mxu0 0.0
        %925 = vmatprep.subr.mxu0 0.0
        %926 = vmatpush1.msra.mxu0 0.0
        %927 = vmatprep.subr.mxu0 0.0
        %928 = vmatpush1.msra.mxu0 0.0
        %929 = vmatprep.subr.mxu0 0.0
        %930 = vmatpush1.msra.mxu0 0.0
        %931 = vmatprep.subr.mxu0 0.0
        %932 = vmatpush1.msra.mxu0 0.0
        %933 = vmatprep.subr.mxu0 0.0
        %934 = vmatpush1.msra.mxu0 0.0
        %935 = vmatprep.subr.mxu0 0.0
        %936 = vmatpush1.msra.mxu0 0.0
        %937 = vmatprep.subr.mxu0 0.0
        %938 = vmatpush1.msra.mxu0 0.0
        %939 = vmatprep.mubr.f32.mxu0 0.0
        %940 = vmatmul.mubr.f32.gmra.mrb[0].mxu0 %v851
        %v941 = vpop.f32.mrb[0].mxu0
        %v942 = vadd.f32 %v873, %v941
        %v943 = vpop.f32.mrb[0].mxu0
        %944 = vdwg.mxu0
        %v945 = vadd.f32 %v757, %v942
        %v946 = vmax.f32 %v945, 0.0
        %947 = vst [vmem:[#allocation2] sm:$0xff] %v946
        %p948 = scmp.eq.s32.totalorder %s38, 1
        // Predicated region
        $region93: #{tpu_custom_call.1} parent=63 // pred_check
          %p949 = pneg %p948
        $region94: #{tpu_custom_call.1} parent=63 // pred_check_branch
          %951 = sbr.rel (%p949) target = $region96
        $region95: #{tpu_custom_call.1} parent=63 // pred_region
          %v952 = vld [vmem:[#allocation12] sm:$0xff]
          %v953 = vld [vmem:[#allocation12 + $0x8] sm:$0xff]
          %v954 = vld [vmem:[#allocation12 + $0x10] sm:$0xff]
          %v955 = vld [vmem:[#allocation12 + $0x18] sm:$0xff]
          %v956 = vld [vmem:[#allocation12 + $0x20] sm:$0xff]
          %v957 = vld [vmem:[#allocation12 + $0x28] sm:$0xff]
          %v958 = vld [vmem:[#allocation12 + $0x30] sm:$0xff]
          %v959 = vld [vmem:[#allocation12 + $0x38] sm:$0xff]
          %v960 = vld [vmem:[#allocation12 + $0x40] sm:$0xff]
          %v961 = vld [vmem:[#allocation12 + $0x48] sm:$0xff]
          %v962 = vld [vmem:[#allocation12 + $0x50] sm:$0xff]
          %v963 = vld [vmem:[#allocation12 + $0x58] sm:$0xff]
          %v964 = vld [vmem:[#allocation12 + $0x60] sm:$0xff]
          %v965 = vld [vmem:[#allocation12 + $0x68] sm:$0xff]
          %v966 = vld [vmem:[#allocation12 + $0x70] sm:$0xff]
          %v967 = vld [vmem:[#allocation12 + $0x78] sm:$0xff]
          %v968 = vld [vmem:[%s10] sm:$0x1]
          %v970 = vlaneseq
          %v971 = vshrl.u32 %v970, 7
          %v972 = vsub.s32 0, %v971
          %v973 = vrot.slane %v968, %v972
          %975 = vmatprep.subr.mxu0 0.0
          %976 = vmatpush1.msra.mxu0 %v952
          %977 = vmatprep.subr.mxu0 0.0
          %978 = vmatpush1.msra.mxu0 %v953
          %979 = vmatprep.subr.mxu0 0.0
          %980 = vmatpush1.msra.mxu0 %v954
          %981 = vmatprep.subr.mxu0 0.0
          %982 = vmatpush1.msra.mxu0 %v955
          %983 = vmatprep.subr.mxu0 0.0
          %984 = vmatpush1.msra.mxu0 %v956
          %985 = vmatprep.subr.mxu0 0.0
          %986 = vmatpush1.msra.mxu0 %v957
          %987 = vmatprep.subr.mxu0 0.0
          %988 = vmatpush1.msra.mxu0 %v958
          %989 = vmatprep.subr.mxu0 0.0
          %990 = vmatpush1.msra.mxu0 %v959
          %991 = vmatprep.subr.mxu0 0.0
          %992 = vmatpush1.msra.mxu0 %v960
          %993 = vmatprep.subr.mxu0 0.0
          %994 = vmatpush1.msra.mxu0 %v961
          %995 = vmatprep.subr.mxu0 0.0
          %996 = vmatpush1.msra.mxu0 %v962
          %997 = vmatprep.subr.mxu0 0.0
          %998 = vmatpush1.msra.mxu0 %v963
          %999 = vmatprep.subr.mxu0 0.0
          %1000 = vmatpush1.msra.mxu0 %v964
          %1001 = vmatprep.subr.mxu0 0.0
          %1002 = vmatpush1.msra.mxu0 %v965
          %1003 = vmatprep.subr.mxu0 0.0
          %1004 = vmatpush1.msra.mxu0 %v966
          %1005 = vmatprep.subr.mxu0 0.0
          %1006 = vmatpush1.msra.mxu0 %v967
          %1007 = vmatprep.subr.mxu0 0.0
          %1008 = vmatpush1.msra.mxu0 0.0
          %1009 = vmatprep.subr.mxu0 0.0
          %1010 = vmatpush1.msra.mxu0 0.0
          %1011 = vmatprep.subr.mxu0 0.0
          %1012 = vmatpush1.msra.mxu0 0.0
          %1013 = vmatprep.subr.mxu0 0.0
          %1014 = vmatpush1.msra.mxu0 0.0
          %1015 = vmatprep.subr.mxu0 0.0
          %1016 = vmatpush1.msra.mxu0 0.0
          %1017 = vmatprep.subr.mxu0 0.0
          %1018 = vmatpush1.msra.mxu0 0.0
          %1019 = vmatprep.subr.mxu0 0.0
          %1020 = vmatpush1.msra.mxu0 0.0
          %1021 = vmatprep.subr.mxu0 0.0
          %1022 = vmatpush1.msra.mxu0 0.0
          %1023 = vmatprep.subr.mxu0 0.0
          %1024 = vmatpush1.msra.mxu0 0.0
          %1025 = vmatprep.subr.mxu0 0.0
          %1026 = vmatpush1.msra.mxu0 0.0
          %1027 = vmatprep.subr.mxu0 0.0
          %1028 = vmatpush1.msra.mxu0 0.0
          %1029 = vmatprep.subr.mxu0 0.0
          %1030 = vmatpush1.msra.mxu0 0.0
          %1031 = vmatprep.subr.mxu0 0.0
          %1032 = vmatpush1.msra.mxu0 0.0
          %1033 = vmatprep.subr.mxu0 0.0
          %1034 = vmatpush1.msra.mxu0 0.0
          %1035 = vmatprep.subr.mxu0 0.0
          %1036 = vmatpush1.msra.mxu0 0.0
          %1037 = vmatprep.subr.mxu0 0.0
          %1038 = vmatpush1.msra.mxu0 0.0
          %1039 = vmatprep.mubr.f32.mxu0 0.0
          %1040 = vmatmul.mubr.f32.gmra.mrb[0].mxu0 %v946
          %v1041 = vpop.f32.mrb[0].mxu0
          %v1042 = vadd.f32 %v973, %v1041
          %v1043 = vpop.f32.mrb[0].mxu0
          %1044 = vdwg.mxu0
          %1045 = vst [vmem:[%s556] sm:$0xff] %v1042
        $region96: #{tpu_custom_call.1} parent=63 // pred_fallthru
          _
        %s1046 = sand.u32 %s309, 1
        %s1047 = scalar_lea.sflag [#allocation5], %s1046
        %s1048 = sand.u32 %s309, 1
        %s1049 = smul.addr %s1048, 8
        %s1050 = scalar_lea.vmem [#allocation14], %s1049
        // Predicated region
        $region97: #{tpu_custom_call.1} parent=63 // pred_check
          %p1051 = pneg %p319
        $region98: #{tpu_custom_call.1} parent=63 // pred_check_branch
          %1053 = sbr.rel (%p1051) target = $region100
        $region99: #{tpu_custom_call.1} parent=63 // pred_region
          %s1055 = ssub.s32 128, 128
          %1056 = vsyncadd %s1047, %s1055
          %s1057 = smul.addr %s37, 128
          %s1058 = scalar_lea.hbm %s11, %s1057
          %s1060 = sshll.u32 %s1050, 4
          %s1061 = int_to_ptr.vmem [resolvable:$true] %s1060
          %1063 = dma.vmem_to_hbm [thread:$0]  %s1061, 128, %s1058, %s1047
        $region100: #{tpu_custom_call.1} parent=63 // pred_fallthru
          _
      $region64: #{tpu_custom_call.1} parent=5 // pred_fallthru
        _
      %p1064 = scmp.le.s32.totalorder 2, %s28
      // Predicated region
      $region101: #{tpu_custom_call.1} parent=5 // pred_check
        %p1065 = pneg %p1064
      $region102: #{tpu_custom_call.1} parent=5 // pred_check_branch
        %1067 = sbr.rel (%p1065) target = $region104
      $region103: #{tpu_custom_call.1} parent=5 // pred_region
        %s1068 = ssub.s32 %s28, 2
        // Predicated region
        $region105: #{tpu_custom_call.1} parent=103 // pred_check
          %p1069 = pneg %p325
        $region106: #{tpu_custom_call.1} parent=103 // pred_check_branch
          %1071 = sbr.rel (%p1069) target = $region108
        $region107: #{tpu_custom_call.1} parent=103 // pred_region
          %s1072 = sand.u32 %s310, 1
          %s1073 = scalar_lea.sflag [#allocation5], %s1072
          %s1074 = sand.u32 %s310, 1
          %s1075 = smul.addr %s1074, 8
          %s1076 = scalar_lea.vmem [#allocation14], %s1075
          %1077 = dma.done %s1073, 128
        $region108: #{tpu_custom_call.1} parent=103 // pred_fallthru
          _
      $region104: #{tpu_custom_call.1} parent=5 // pred_fallthru
        _
    $region6: #{tpu_custom_call.1} parent=1 // loop_footer
      %s32 = sadd.s32 1, %s28
    $region7: #{tpu_custom_call.1} parent=1 // loop_footer_branch
      %27 = sbr.rel target = $region3
    $region8: #{tpu_custom_call.1} parent=1 // loop_exit
      _
    %1078 = vsyncpa [#allocation4], 1
    %s1079 = scalar_lea.sflag [#allocation4], 1
    %1080 = vsyncpa %s1079, 1
    %1081 = vsyncpa [#allocation7], 1
    %1082 = vsyncpa [#allocation10], 1
    %s1083 = scalar_lea.sflag [#allocation10], 1
    %1084 = vsyncpa %s1083, 1
    %1085 = vsyncpa [#allocation13], 1
    %1086 = vsyncpa [#allocation5], 1
    %s1087 = scalar_lea.sflag [#allocation5], 1
    %1088 = vsyncpa %s1087, 1

</llo_original>
